<compile_context>
chip_gen: v5e
topology: v5e:2x2
jax: 0.10.0
libtpu: 0.0.40
codegen_flags: <defaults>
</compile_context>

<pallas_src>
import functools
import math

import jax
import jax.numpy as jnp
from jax.experimental import pallas as pl
from jax.experimental.pallas import tpu as pltpu

HIDDEN = 32
NUM_HEADS = 4
HEAD_DIM = HIDDEN // NUM_HEADS
SCALE = 1.0 / math.sqrt(HEAD_DIM)


def _mha_kernel(x_ref, wqkv_ref, bqkv_ref, wo_ref, bo_ref, out_ref):
    # One grid step == one batch element; scores are (S, S), no cross-batch mask.
    x = x_ref[0]                                              # (S, H)

    # Fused QKV projection: one (S,H) x (H,3H) MXU push + one broadcast bias add.
    # SCALE is pre-folded into the Q third of wqkv/bqkv.
    qkv = jnp.dot(x, wqkv_ref[...], preferred_element_type=jnp.float32) + bqkv_ref[...]

    ctx_heads = []
    for h in range(NUM_HEADS):                                # static loop, static lane offsets
        lo = h * HEAD_DIM
        qh = qkv[:, lo:lo + HEAD_DIM]                         # (S, D), already scaled
        kh = qkv[:, HIDDEN + lo:HIDDEN + lo + HEAD_DIM]       # (S, D)
        vh = qkv[:, 2 * HIDDEN + lo:2 * HIDDEN + lo + HEAD_DIM]

        # scores = (scale*q) @ k^T, contracting the head dim directly (no transpose).
        scores = jax.lax.dot_general(
            qh, kh, (((1,), (1,)), ((), ())),
            preferred_element_type=jnp.float32)               # (S, S)

        scores = scores - jnp.max(scores, axis=-1, keepdims=True)
        p = jnp.exp(scores)
        d = jnp.sum(p, axis=-1, keepdims=True)
        # EUP approx reciprocal + one Newton-Raphson step (error << 1e-4).
        r = pl.reciprocal(d, approx=True)
        r = r * (2.0 - d * r)
        probs = p * r

        ctx_heads.append(jnp.dot(probs, vh, preferred_element_type=jnp.float32))

    # Re-pack heads along lanes (H=32 lives inside one vreg's lanes) and do a
    # single K=32 out-proj matmul instead of four K=8 matmuls.
    ctx = jnp.concatenate(ctx_heads, axis=1)                  # (S, H)
    out = jnp.dot(ctx, wo_ref[...], preferred_element_type=jnp.float32) + bo_ref[...]
    out_ref[0] = out.astype(out_ref.dtype)


def pack_params(params):
    """One-time parameter packing. Call at init, NOT per forward.

    Produces a fused, pre-transposed QKV weight (H, 3H) with SCALE folded into
    the Q third (weight and bias), plus the pre-transposed out-proj weight.
    """
    wqkv = jnp.concatenate(
        [params["wq"].T * SCALE, params["wk"].T, params["wv"].T], axis=1)   # (H, 3H)
    bqkv = jnp.concatenate(
        [params["bq"] * SCALE, params["bk"], params["bv"]], axis=1)         # (1, 3H)
    return {
        "wqkv": wqkv,
        "bqkv": bqkv,
        "wo_t": params["wo"].T,                                             # (H, H)
        "bo": params["bo"],                                                 # (1, H)
    }


@jax.jit
def multi_head_attention(x, packed):
    """x: (B, S, H) float32.  packed: output of pack_params (cached at init)."""
    B, S, H = x.shape
    assert H == HIDDEN

    return pl.pallas_call(
        _mha_kernel,
        out_shape=jax.ShapeDtypeStruct((B, S, H), x.dtype),
        grid=(B,),
        in_specs=[
            pl.BlockSpec((1, S, H), lambda b: (b, 0, 0)),          # per-batch x tile
            pl.BlockSpec((H, 3 * H), lambda b: (0, 0)),            # weights: constant
            pl.BlockSpec((1, 3 * H), lambda b: (0, 0)),            #   block -> loaded
            pl.BlockSpec((H, H), lambda b: (0, 0)),                #   into VMEM once
            pl.BlockSpec((1, H), lambda b: (0, 0)),
        ],
        out_specs=pl.BlockSpec((1, S, H), lambda b: (b, 0, 0)),
        compiler_params=pltpu.CompilerParams(
            dimension_semantics=("parallel",)),                    # megacore on v7x
    )(x, packed["wqkv"], packed["bqkv"], packed["wo_t"], packed["bo"])


def _reference(x, params):
    """Pure-JAX reference mirroring the PyTorch forward (eval mode)."""
    B, S, H = x.shape

    def lin(t, w, b):
        return t @ w.T + b

    q = lin(x, params["wq"], params["bq"])
    k = lin(x, params["wk"], params["bk"])
    v = lin(x, params["wv"], params["bv"])

    def split(t):  # (B,S,H) -> (B,nh,S,D)
        return t.reshape(B, S, NUM_HEADS, HEAD_DIM).transpose(0, 2, 1, 3)

    q, k, v = split(q), split(k), split(v)
    scores = jnp.einsum("bhqd,bhkd->bhqk", q, k) * SCALE
    w = jax.nn.softmax(scores, axis=-1)
    ctx = jnp.einsum("bhqk,bhkd->bhqd", w, v)
    ctx = ctx.transpose(0, 2, 1, 3).reshape(B, S, H)
    return lin(ctx, params["wo"], params["bo"])


def _init_params(key):
    ks = jax.random.split(key, 8)
    bound = 1.0 / math.sqrt(HIDDEN)

    def w(k):
        return jax.random.uniform(k, (HIDDEN, HIDDEN), jnp.float32, -bound, bound)

    def b(k):
        return jax.random.uniform(k, (1, HIDDEN), jnp.float32, -bound, bound)

    return {
        "wq": w(ks[0]), "bq": b(ks[1]),
        "wk": w(ks[2]), "bk": b(ks[3]),
        "wv": w(ks[4]), "bv": b(ks[5]),
        "wo": w(ks[6]), "bo": b(ks[7]),
    }


if __name__ == "__main__":
    key = jax.random.PRNGKey(0)
    k_x, k_p = jax.random.split(key)

    B, S = 2, 8
    x = jax.random.normal(k_x, (B, S, HIDDEN), jnp.float32)
    params = _init_params(k_p)

    packed = jax.tree_util.tree_map(jax.block_until_ready,
                                    pack_params(params))  # one-time init cost

    out = multi_head_attention(x, packed)
    out = jax.block_until_ready(out)

    ref = _reference(x, params)
    assert out.shape == (B, S, HIDDEN)
    assert jnp.allclose(out, ref, atol=1e-4, rtol=1e-4)

    print("KERNEL_OK")
</pallas_src>

<mosaic_0001>
module attributes {stable_mosaic.version = 11 : i64} {
  func.func @_mha_kernel(%arg0: i32, %arg1: memref<1x8x32xf32, #tpu.memory_space<vmem>>, %arg2: memref<32x96xf32, #tpu.memory_space<vmem>>, %arg3: memref<1x96xf32, #tpu.memory_space<vmem>>, %arg4: memref<32x32xf32, #tpu.memory_space<vmem>>, %arg5: memref<1x32xf32, #tpu.memory_space<vmem>>, %arg6: memref<1x8x32xf32, #tpu.memory_space<vmem>>) attributes {dimension_semantics = [#tpu.dimension_semantics<parallel>], iteration_bounds = array<i64: 2>, scalar_prefetch = 0 : i64, scratch_operands = 0 : i64, tpu.core_type = #tpu.core_type<tc>, window_params = [{transform_indices = @transform_0, window_bounds = array<i64: 1, 8, 32>}, {pipeline_mode = #tpu.pipeline_mode<synchronous>, transform_indices = @transform_1, window_bounds = array<i64: 32, 96>}, {pipeline_mode = #tpu.pipeline_mode<synchronous>, transform_indices = @transform_2, window_bounds = array<i64: 1, 96>}, {pipeline_mode = #tpu.pipeline_mode<synchronous>, transform_indices = @transform_3, window_bounds = array<i64: 32, 32>}, {pipeline_mode = #tpu.pipeline_mode<synchronous>, transform_indices = @transform_4, window_bounds = array<i64: 1, 32>}, {transform_indices = @transform_5, window_bounds = array<i64: 1, 8, 32>}]} {
    %c0 = arith.constant 0 : index
    %c0_0 = arith.constant 0 : index
    %c0_1 = arith.constant 0 : index
    %0 = vector.load %arg1[%c0, %c0_0, %c0_1] : memref<1x8x32xf32, #tpu.memory_space<vmem>>, vector<1x8x32xf32>
    %1 = vector.shape_cast %0 : vector<1x8x32xf32> to vector<8x32xf32>
    %c0_2 = arith.constant 0 : index
    %c0_3 = arith.constant 0 : index
    %2 = vector.load %arg2[%c0_2, %c0_3] : memref<32x96xf32, #tpu.memory_space<vmem>>, vector<32x96xf32>
    %cst = arith.constant dense<0.000000e+00> : vector<8x96xf32>
    %3 = tpu.matmul %1, %2, %cst {dimension_numbers = #tpu.dot_dimension_numbers<[1], [0], [0], [1], [0, 0, 1, 1], [], []>} : vector<8x32xf32>, vector<32x96xf32>, vector<8x96xf32> -> vector<8x96xf32>
    %c0_4 = arith.constant 0 : index
    %c0_5 = arith.constant 0 : index
    %4 = vector.load %arg3[%c0_4, %c0_5] : memref<1x96xf32, #tpu.memory_space<vmem>>, vector<1x96xf32>
    %5 = vector.broadcast %4 : vector<1x96xf32> to vector<8x96xf32>
    %6 = arith.addf %3, %5 : vector<8x96xf32>
    %7 = vector.extract_strided_slice %6 {offsets = [0, 0], sizes = [8, 8], strides = [1, 1]} : vector<8x96xf32> to vector<8x8xf32>
    %8 = vector.extract_strided_slice %6 {offsets = [0, 32], sizes = [8, 8], strides = [1, 1]} : vector<8x96xf32> to vector<8x8xf32>
    %9 = vector.extract_strided_slice %6 {offsets = [0, 64], sizes = [8, 8], strides = [1, 1]} : vector<8x96xf32> to vector<8x8xf32>
    %cst_6 = arith.constant dense<0.000000e+00> : vector<8x8xf32>
    %10 = tpu.matmul %7, %8, %cst_6 {dimension_numbers = #tpu.dot_dimension_numbers<[1], [1], [0], [0], [0, 0, 1, 0], [], []>} : vector<8x8xf32>, vector<8x8xf32>, vector<8x8xf32> -> vector<8x8xf32>
    %cst_7 = arith.constant dense<0xFF800000> : vector<8xf32>
    %11 = vector.multi_reduction <maximumf>, %10, %cst_7 [1] : vector<8x8xf32> to vector<8xf32>
    %12 = vector.shape_cast %11 : vector<8xf32> to vector<8x1xf32>
    %13 = vector.broadcast %12 : vector<8x1xf32> to vector<8x8xf32>
    %14 = arith.subf %10, %13 : vector<8x8xf32>
    %15 = math.exp %14 : vector<8x8xf32>
    %cst_8 = arith.constant dense<0.000000e+00> : vector<8xf32>
    %16 = vector.multi_reduction <add>, %15, %cst_8 [1] : vector<8x8xf32> to vector<8xf32>
    %17 = vector.shape_cast %16 : vector<8xf32> to vector<8x1xf32>
    %18 = tpu.reciprocal %17 {approx = true} : vector<8x1xf32> -> vector<8x1xf32>
    %19 = arith.mulf %17, %18 : vector<8x1xf32>
    %cst_9 = arith.constant 2.000000e+00 : f32
    %20 = vector.broadcast %cst_9 : f32 to vector<8x1xf32>
    %21 = arith.subf %20, %19 : vector<8x1xf32>
    %22 = arith.mulf %18, %21 : vector<8x1xf32>
    %23 = vector.broadcast %22 : vector<8x1xf32> to vector<8x8xf32>
    %24 = arith.mulf %15, %23 : vector<8x8xf32>
    %cst_10 = arith.constant dense<0.000000e+00> : vector<8x8xf32>
    %25 = tpu.matmul %24, %9, %cst_10 {dimension_numbers = #tpu.dot_dimension_numbers<[1], [0], [0], [1], [0, 0, 1, 1], [], []>} : vector<8x8xf32>, vector<8x8xf32>, vector<8x8xf32> -> vector<8x8xf32>
    %26 = vector.extract_strided_slice %6 {offsets = [0, 8], sizes = [8, 8], strides = [1, 1]} : vector<8x96xf32> to vector<8x8xf32>
    %27 = vector.extract_strided_slice %6 {offsets = [0, 40], sizes = [8, 8], strides = [1, 1]} : vector<8x96xf32> to vector<8x8xf32>
    %28 = vector.extract_strided_slice %6 {offsets = [0, 72], sizes = [8, 8], strides = [1, 1]} : vector<8x96xf32> to vector<8x8xf32>
    %cst_11 = arith.constant dense<0.000000e+00> : vector<8x8xf32>
    %29 = tpu.matmul %26, %27, %cst_11 {dimension_numbers = #tpu.dot_dimension_numbers<[1], [1], [0], [0], [0, 0, 1, 0], [], []>} : vector<8x8xf32>, vector<8x8xf32>, vector<8x8xf32> -> vector<8x8xf32>
    %cst_12 = arith.constant dense<0xFF800000> : vector<8xf32>
    %30 = vector.multi_reduction <maximumf>, %29, %cst_12 [1] : vector<8x8xf32> to vector<8xf32>
    %31 = vector.shape_cast %30 : vector<8xf32> to vector<8x1xf32>
    %32 = vector.broadcast %31 : vector<8x1xf32> to vector<8x8xf32>
    %33 = arith.subf %29, %32 : vector<8x8xf32>
    %34 = math.exp %33 : vector<8x8xf32>
    %cst_13 = arith.constant dense<0.000000e+00> : vector<8xf32>
    %35 = vector.multi_reduction <add>, %34, %cst_13 [1] : vector<8x8xf32> to vector<8xf32>
    %36 = vector.shape_cast %35 : vector<8xf32> to vector<8x1xf32>
    %37 = tpu.reciprocal %36 {approx = true} : vector<8x1xf32> -> vector<8x1xf32>
    %38 = arith.mulf %36, %37 : vector<8x1xf32>
    %cst_14 = arith.constant 2.000000e+00 : f32
    %39 = vector.broadcast %cst_14 : f32 to vector<8x1xf32>
    %40 = arith.subf %39, %38 : vector<8x1xf32>
    %41 = arith.mulf %37, %40 : vector<8x1xf32>
    %42 = vector.broadcast %41 : vector<8x1xf32> to vector<8x8xf32>
    %43 = arith.mulf %34, %42 : vector<8x8xf32>
    %cst_15 = arith.constant dense<0.000000e+00> : vector<8x8xf32>
    %44 = tpu.matmul %43, %28, %cst_15 {dimension_numbers = #tpu.dot_dimension_numbers<[1], [0], [0], [1], [0, 0, 1, 1], [], []>} : vector<8x8xf32>, vector<8x8xf32>, vector<8x8xf32> -> vector<8x8xf32>
    %45 = vector.extract_strided_slice %6 {offsets = [0, 16], sizes = [8, 8], strides = [1, 1]} : vector<8x96xf32> to vector<8x8xf32>
    %46 = vector.extract_strided_slice %6 {offsets = [0, 48], sizes = [8, 8], strides = [1, 1]} : vector<8x96xf32> to vector<8x8xf32>
    %47 = vector.extract_strided_slice %6 {offsets = [0, 80], sizes = [8, 8], strides = [1, 1]} : vector<8x96xf32> to vector<8x8xf32>
    %cst_16 = arith.constant dense<0.000000e+00> : vector<8x8xf32>
    %48 = tpu.matmul %45, %46, %cst_16 {dimension_numbers = #tpu.dot_dimension_numbers<[1], [1], [0], [0], [0, 0, 1, 0], [], []>} : vector<8x8xf32>, vector<8x8xf32>, vector<8x8xf32> -> vector<8x8xf32>
    %cst_17 = arith.constant dense<0xFF800000> : vector<8xf32>
    %49 = vector.multi_reduction <maximumf>, %48, %cst_17 [1] : vector<8x8xf32> to vector<8xf32>
    %50 = vector.shape_cast %49 : vector<8xf32> to vector<8x1xf32>
    %51 = vector.broadcast %50 : vector<8x1xf32> to vector<8x8xf32>
    %52 = arith.subf %48, %51 : vector<8x8xf32>
    %53 = math.exp %52 : vector<8x8xf32>
    %cst_18 = arith.constant dense<0.000000e+00> : vector<8xf32>
    %54 = vector.multi_reduction <add>, %53, %cst_18 [1] : vector<8x8xf32> to vector<8xf32>
    %55 = vector.shape_cast %54 : vector<8xf32> to vector<8x1xf32>
    %56 = tpu.reciprocal %55 {approx = true} : vector<8x1xf32> -> vector<8x1xf32>
    %57 = arith.mulf %55, %56 : vector<8x1xf32>
    %cst_19 = arith.constant 2.000000e+00 : f32
    %58 = vector.broadcast %cst_19 : f32 to vector<8x1xf32>
    %59 = arith.subf %58, %57 : vector<8x1xf32>
    %60 = arith.mulf %56, %59 : vector<8x1xf32>
    %61 = vector.broadcast %60 : vector<8x1xf32> to vector<8x8xf32>
    %62 = arith.mulf %53, %61 : vector<8x8xf32>
    %cst_20 = arith.constant dense<0.000000e+00> : vector<8x8xf32>
    %63 = tpu.matmul %62, %47, %cst_20 {dimension_numbers = #tpu.dot_dimension_numbers<[1], [0], [0], [1], [0, 0, 1, 1], [], []>} : vector<8x8xf32>, vector<8x8xf32>, vector<8x8xf32> -> vector<8x8xf32>
    %64 = vector.extract_strided_slice %6 {offsets = [0, 24], sizes = [8, 8], strides = [1, 1]} : vector<8x96xf32> to vector<8x8xf32>
    %65 = vector.extract_strided_slice %6 {offsets = [0, 56], sizes = [8, 8], strides = [1, 1]} : vector<8x96xf32> to vector<8x8xf32>
    %66 = vector.extract_strided_slice %6 {offsets = [0, 88], sizes = [8, 8], strides = [1, 1]} : vector<8x96xf32> to vector<8x8xf32>
    %cst_21 = arith.constant dense<0.000000e+00> : vector<8x8xf32>
    %67 = tpu.matmul %64, %65, %cst_21 {dimension_numbers = #tpu.dot_dimension_numbers<[1], [1], [0], [0], [0, 0, 1, 0], [], []>} : vector<8x8xf32>, vector<8x8xf32>, vector<8x8xf32> -> vector<8x8xf32>
    %cst_22 = arith.constant dense<0xFF800000> : vector<8xf32>
    %68 = vector.multi_reduction <maximumf>, %67, %cst_22 [1] : vector<8x8xf32> to vector<8xf32>
    %69 = vector.shape_cast %68 : vector<8xf32> to vector<8x1xf32>
    %70 = vector.broadcast %69 : vector<8x1xf32> to vector<8x8xf32>
    %71 = arith.subf %67, %70 : vector<8x8xf32>
    %72 = math.exp %71 : vector<8x8xf32>
    %cst_23 = arith.constant dense<0.000000e+00> : vector<8xf32>
    %73 = vector.multi_reduction <add>, %72, %cst_23 [1] : vector<8x8xf32> to vector<8xf32>
    %74 = vector.shape_cast %73 : vector<8xf32> to vector<8x1xf32>
    %75 = tpu.reciprocal %74 {approx = true} : vector<8x1xf32> -> vector<8x1xf32>
    %76 = arith.mulf %74, %75 : vector<8x1xf32>
    %cst_24 = arith.constant 2.000000e+00 : f32
    %77 = vector.broadcast %cst_24 : f32 to vector<8x1xf32>
    %78 = arith.subf %77, %76 : vector<8x1xf32>
    %79 = arith.mulf %75, %78 : vector<8x1xf32>
    %80 = vector.broadcast %79 : vector<8x1xf32> to vector<8x8xf32>
    %81 = arith.mulf %72, %80 : vector<8x8xf32>
    %cst_25 = arith.constant dense<0.000000e+00> : vector<8x8xf32>
    %82 = tpu.matmul %81, %66, %cst_25 {dimension_numbers = #tpu.dot_dimension_numbers<[1], [0], [0], [1], [0, 0, 1, 1], [], []>} : vector<8x8xf32>, vector<8x8xf32>, vector<8x8xf32> -> vector<8x8xf32>
    %83 = tpu.concatenate %25, %44, %63, %82 in 1 : vector<8x8xf32>, vector<8x8xf32>, vector<8x8xf32>, vector<8x8xf32> -> vector<8x32xf32>
    %c0_26 = arith.constant 0 : index
    %c0_27 = arith.constant 0 : index
    %84 = vector.load %arg4[%c0_26, %c0_27] : memref<32x32xf32, #tpu.memory_space<vmem>>, vector<32x32xf32>
    %cst_28 = arith.constant dense<0.000000e+00> : vector<8x32xf32>
    %85 = tpu.matmul %83, %84, %cst_28 {dimension_numbers = #tpu.dot_dimension_numbers<[1], [0], [0], [1], [0, 0, 1, 1], [], []>} : vector<8x32xf32>, vector<32x32xf32>, vector<8x32xf32> -> vector<8x32xf32>
    %c0_29 = arith.constant 0 : index
    %c0_30 = arith.constant 0 : index
    %86 = vector.load %arg5[%c0_29, %c0_30] : memref<1x32xf32, #tpu.memory_space<vmem>>, vector<1x32xf32>
    %87 = vector.broadcast %86 : vector<1x32xf32> to vector<8x32xf32>
    %88 = arith.addf %85, %87 : vector<8x32xf32>
    %c0_31 = arith.constant 0 : index
    %c0_32 = arith.constant 0 : index
    %c0_33 = arith.constant 0 : index
    %89 = vector.load %arg6[%c0_31, %c0_32, %c0_33] : memref<1x8x32xf32, #tpu.memory_space<vmem>>, vector<1x8x32xf32>
    %90 = vector.shape_cast %89 : vector<1x8x32xf32> to vector<8x32xf32>
    %91 = vector.shape_cast %88 : vector<8x32xf32> to vector<1x8x32xf32>
    tpu.vector_store %arg6[%c0_31, %c0_32, %c0_33], %91 {strides = array<i32>} : memref<1x8x32xf32, #tpu.memory_space<vmem>>, vector<1x8x32xf32>,
    return
  }
  func.func @transform_0(%arg0: i32) -> (i32, i32, i32) {
    %c0_i32 = arith.constant 0 : i32
    %c0_i32_0 = arith.constant 0 : i32
    %c0_i32_1 = arith.constant 0 : i32
    return %arg0, %c0_i32, %c0_i32_0 : i32, i32, i32
  }
  func.func @transform_1(%arg0: i32) -> (i32, i32) {
    %c0_i32 = arith.constant 0 : i32
    %c0_i32_0 = arith.constant 0 : i32
    %c0_i32_1 = arith.constant 0 : i32
    return %c0_i32, %c0_i32_0 : i32, i32
  }
  func.func @transform_2(%arg0: i32) -> (i32, i32) {
    %c0_i32 = arith.constant 0 : i32
    %c0_i32_0 = arith.constant 0 : i32
    %c0_i32_1 = arith.constant 0 : i32
    return %c0_i32, %c0_i32_0 : i32, i32
  }
  func.func @transform_3(%arg0: i32) -> (i32, i32) {
    %c0_i32 = arith.constant 0 : i32
    %c0_i32_0 = arith.constant 0 : i32
    %c0_i32_1 = arith.constant 0 : i32
    return %c0_i32, %c0_i32_0 : i32, i32
  }
  func.func @transform_4(%arg0: i32) -> (i32, i32) {
    %c0_i32 = arith.constant 0 : i32
    %c0_i32_0 = arith.constant 0 : i32
    %c0_i32_1 = arith.constant 0 : i32
    return %c0_i32, %c0_i32_0 : i32, i32
  }
  func.func @transform_5(%arg0: i32) -> (i32, i32, i32) {
    %c0_i32 = arith.constant 0 : i32
    %c0_i32_0 = arith.constant 0 : i32
    %c0_i32_1 = arith.constant 0 : i32
    return %arg0, %c0_i32, %c0_i32_0 : i32, i32, i32
  }
}

</mosaic_0001>

<llo_original>
// kernel: multi_head_attention.1
$region0: #{multi_head_attention.1}
  #allocation0 [shape = 'u32[]', space=smem, size = 0x4, offset = 0x4, fixed_abs, tag = 'smem constant byte address 0x4 - core index']
  #allocation1 [shape = 'u32[72,128]{1,0:T(1,128)}', space=vmem, size = 0x9000, scoped, tag = 'internal scratch']
  %s0 = inlined_call_operand.hbm [shape: f32[2,8,32], index: 0, kind: input, shape index: {}]
  %s1 = inlined_call_operand.hbm [shape: f32[32,96], index: 1, kind: input, shape index: {}]
  %s2 = inlined_call_operand.vmem [shape: f32[1,96], index: 2, kind: input, shape index: {}]
  %s3 = inlined_call_operand.hbm [shape: f32[32,32], index: 3, kind: input, shape index: {}]
  %s4 = inlined_call_operand.hbm [shape: f32[1,32], index: 4, kind: input, shape index: {}]
  %s5 = inlined_call_operand.hbm [shape: f32[2,8,32], index: 5, kind: output, shape index: {}]
  %s6 = sld [smem:[#allocation0]]
  $region69: #{multi_head_attention.1} parent=0
    _
  %s8 = ssub.s32 1, %s6
  %s9 = scalar_select 0, %s8, %s6
  $region1: #{multi_head_attention.1} parent=0
    #allocation2 [shape = 'u8[8192]{0}', space=vmem, size = 0x2000, scoped, tag = 'input window, operand 0']
    #allocation3 [shape = 's32[2]{0}', space=sflag, size = 0x8, scoped, tag = 'scoped memory for multi_head_attention.1']
    #allocation4 [shape = 's32[2]{0}', space=sflag, size = 0x8, scoped, tag = 'scoped memory for multi_head_attention.1']
    #allocation5 [shape = 'u8[16384]{0}', space=vmem, size = 0x4000, scoped, tag = 'input window, operand 1, single buffered']
    #allocation6 [shape = 's32[1]{0}', space=sflag, size = 0x4, scoped, tag = 'scoped memory for multi_head_attention.1']
    #allocation7 [shape = 'u8[16384]{0}', space=vmem, size = 0x4000, scoped, tag = 'input window, operand 3, single buffered']
    #allocation8 [shape = 'u8[512]{0}', space=vmem, size = 0x400, scoped, tag = 'input window, operand 4, single buffered']
    #allocation9 [shape = 's32[1]{0}', space=sflag, size = 0x4, scoped, tag = 'scoped memory for multi_head_attention.1']
    #allocation10 [shape = 'u8[8192]{0}', space=vmem, size = 0x2000, scoped, tag = 'output window, operand 0']
    %10 = vsyncpa [#allocation3], 0
    %s11 = scalar_lea.sflag [#allocation3], 1
    %12 = vsyncpa %s11, 0
    %13 = vsyncpa [#allocation6], 0
    %14 = vsyncpa [#allocation9], 0
    %15 = vsyncpa [#allocation4], 0
    %s16 = scalar_lea.sflag [#allocation4], 1
    %17 = vsyncpa %s16, 0
    loop: start=0, step=1, limit=4
    $region2: #{multi_head_attention.1} parent=1 // loop_pre_header
      _
    $region3: #{multi_head_attention.1} parent=1 // loop_header
      %s19 = sphi 0, %s23
      %p20 = scmp.ge.s32.totalorder %s19, 4
      %s29 = sphi 0, %s31
      %s32 = sphi 0, %s29
      %s33 = sphi 0, %s32
      %s49 = sphi 0, %s33
      %s53 = sphi 0, %s53
      %s55 = sphi 0, %s53
      %s56 = sphi 0, %s55
      %s70 = sphi 0, %s56
      %s74 = sphi 0, %s74
      %s76 = sphi 0, %s74
      %s77 = sphi 0, %s76
      %s91 = sphi 0, %s77
      %s95 = sphi 0, %s95
      %s97 = sphi 0, %s95
      %s98 = sphi 0, %s97
      %s112 = sphi 0, %s98
      %s116 = sphi 0, %s116
      %s118 = sphi 0, %s116
      %s119 = sphi 0, %s118
      %s133 = sphi 0, %s119
      %s139 = sphi 0, %s141
      %s142 = sphi 0, %s139
      %s143 = sphi 0, %s142
      %s159 = sphi 0, %s143
    $region4: #{multi_head_attention.1} parent=1 // loop_header_branch
      %22 = sbr.rel (%p20) target = $region8
    $region5: #{multi_head_attention.1} parent=1 // loop_body
      %s24 = ssub.s32 %s19, 1
      %s25 = ssub.s32 %s19, 2
      %s26 = sadd.s32 %s19, 1
      %s27 = ssub.s32 %s19, %s26
      %p28 = scmp.eq.s32.totalorder %s27, 0
      %s30 = sadd.s32 %s29, 1
      %s31 = scalar_select %p28, %s29, %s30
      %p34 = pneg %p28
      %p35 = scmp.eq.s32.totalorder %s19, 1
      %p36 = por %p34, %p35
      %p37 = scmp.ne.s32.totalorder %s29, %s32
      %p38 = scmp.eq.s32.totalorder %s19, 0
      %p39 = por %p37, %p38
      %p40 = scmp.ne.s32.totalorder %s29, %s32
      %p41 = scmp.eq.s32.totalorder %s24, 1
      %p42 = por %p40, %p41
      %p43 = scmp.ne.s32.totalorder %s32, %s33
      %p44 = scmp.eq.s32.totalorder %s24, 0
      %p45 = por %p43, %p44
      %p46 = scmp.ne.s32.totalorder %s32, %s33
      %p47 = scmp.eq.s32.totalorder %s25, 1
      %p48 = por %p46, %p47
      %p50 = scmp.ne.s32.totalorder %s33, %s49
      %p51 = scmp.eq.s32.totalorder %s25, 0
      %p52 = por %p50, %p51
      %s54 = sadd.s32 %s53, 1
      %p57 = scmp.eq.s32.totalorder %s19, 1
      %p58 = scmp.ne.s32.totalorder %s53, %s55
      %p59 = scmp.eq.s32.totalorder %s19, 0
      %p60 = por %p58, %p59
      %p61 = scmp.ne.s32.totalorder %s53, %s55
      %p62 = scmp.eq.s32.totalorder %s24, 1
      %p63 = por %p61, %p62
      %p64 = scmp.ne.s32.totalorder %s55, %s56
      %p65 = scmp.eq.s32.totalorder %s24, 0
      %p66 = por %p64, %p65
      %p67 = scmp.ne.s32.totalorder %s55, %s56
      %p68 = scmp.eq.s32.totalorder %s25, 1
      %p69 = por %p67, %p68
      %p71 = scmp.ne.s32.totalorder %s56, %s70
      %p72 = scmp.eq.s32.totalorder %s25, 0
      %p73 = por %p71, %p72
      %s75 = sadd.s32 %s74, 1
      %p78 = scmp.eq.s32.totalorder %s19, 1
      %p79 = scmp.ne.s32.totalorder %s74, %s76
      %p80 = scmp.eq.s32.totalorder %s19, 0
      %p81 = por %p79, %p80
      %p82 = scmp.ne.s32.totalorder %s74, %s76
      %p83 = scmp.eq.s32.totalorder %s24, 1
      %p84 = por %p82, %p83
      %p85 = scmp.ne.s32.totalorder %s76, %s77
      %p86 = scmp.eq.s32.totalorder %s24, 0
      %p87 = por %p85, %p86
      %p88 = scmp.ne.s32.totalorder %s76, %s77
      %p89 = scmp.eq.s32.totalorder %s25, 1
      %p90 = por %p88, %p89
      %p92 = scmp.ne.s32.totalorder %s77, %s91
      %p93 = scmp.eq.s32.totalorder %s25, 0
      %p94 = por %p92, %p93
      %s96 = sadd.s32 %s95, 1
      %p99 = scmp.eq.s32.totalorder %s19, 1
      %p100 = scmp.ne.s32.totalorder %s95, %s97
      %p101 = scmp.eq.s32.totalorder %s19, 0
      %p102 = por %p100, %p101
      %p103 = scmp.ne.s32.totalorder %s95, %s97
      %p104 = scmp.eq.s32.totalorder %s24, 1
      %p105 = por %p103, %p104
      %p106 = scmp.ne.s32.totalorder %s97, %s98
      %p107 = scmp.eq.s32.totalorder %s24, 0
      %p108 = por %p106, %p107
      %p109 = scmp.ne.s32.totalorder %s97, %s98
      %p110 = scmp.eq.s32.totalorder %s25, 1
      %p111 = por %p109, %p110
      %p113 = scmp.ne.s32.totalorder %s98, %s112
      %p114 = scmp.eq.s32.totalorder %s25, 0
      %p115 = por %p113, %p114
      %s117 = sadd.s32 %s116, 1
      %p120 = scmp.eq.s32.totalorder %s19, 1
      %p121 = scmp.ne.s32.totalorder %s116, %s118
      %p122 = scmp.eq.s32.totalorder %s19, 0
      %p123 = por %p121, %p122
      %p124 = scmp.ne.s32.totalorder %s116, %s118
      %p125 = scmp.eq.s32.totalorder %s24, 1
      %p126 = por %p124, %p125
      %p127 = scmp.ne.s32.totalorder %s118, %s119
      %p128 = scmp.eq.s32.totalorder %s24, 0
      %p129 = por %p127, %p128
      %p130 = scmp.ne.s32.totalorder %s118, %s119
      %p131 = scmp.eq.s32.totalorder %s25, 1
      %p132 = por %p130, %p131
      %p134 = scmp.ne.s32.totalorder %s119, %s133
      %p135 = scmp.eq.s32.totalorder %s25, 0
      %p136 = por %p134, %p135
      %s137 = ssub.s32 %s19, %s26
      %p138 = scmp.eq.s32.totalorder %s137, 0
      %s140 = sadd.s32 %s139, 1
      %s141 = scalar_select %p138, %s139, %s140
      %p144 = pneg %p138
      %p145 = scmp.eq.s32.totalorder %s19, 1
      %p146 = por %p144, %p145
      %p147 = scmp.ne.s32.totalorder %s139, %s142
      %p148 = scmp.eq.s32.totalorder %s19, 0
      %p149 = por %p147, %p148
      %p150 = scmp.ne.s32.totalorder %s139, %s142
      %p151 = scmp.eq.s32.totalorder %s24, 1
      %p152 = por %p150, %p151
      %p153 = scmp.ne.s32.totalorder %s142, %s143
      %p154 = scmp.eq.s32.totalorder %s24, 0
      %p155 = por %p153, %p154
      %p156 = scmp.ne.s32.totalorder %s142, %s143
      %p157 = scmp.eq.s32.totalorder %s25, 1
      %p158 = por %p156, %p157
      %p160 = scmp.ne.s32.totalorder %s143, %s159
      %p161 = scmp.eq.s32.totalorder %s25, 0
      %p162 = por %p160, %p161
      %p163 = scmp.le.s32.totalorder 1, %s19
      %p164 = scmp.lt.s32.totalorder %s19, 3
      %p165 = pnand %p163, %p164
      %p166 = pneg %p165
      // Predicated region
      $region9: #{multi_head_attention.1} parent=5 // pred_check
        _
      $region10: #{multi_head_attention.1} parent=5 // pred_check_branch
        %168 = sbr.rel (%p165) target = $region12
      $region11: #{multi_head_attention.1} parent=5 // pred_region
        %s169 = ssub.s32 %s19, 1
        // Predicated region
        $region13: #{multi_head_attention.1} parent=11 // pred_check
          %p170 = pneg %p66
        $region14: #{multi_head_attention.1} parent=11 // pred_check_branch
          %172 = sbr.rel (%p170) target = $region16
        $region15: #{multi_head_attention.1} parent=11 // pred_region
          %174 = vsyncadd [#allocation6], 0
          %s175 = sshll.u32 %s1, 4
          %s176 = int_to_ptr.hbm [resolvable:$true] %s175
          %s177 = sshll.u32 [#allocation5], 4
          %s178 = int_to_ptr.vmem [resolvable:$true] %s177
          %183 = dma.hbm_to_vmem [thread:$0]  %s176, 512, %s178, [#allocation6], 128, 128, 8
        $region16: #{multi_head_attention.1} parent=11 // pred_fallthru
          _
        // Predicated region
        $region17: #{multi_head_attention.1} parent=11 // pred_check
          %p184 = pneg %p87
        $region18: #{multi_head_attention.1} parent=11 // pred_check_branch
          %186 = sbr.rel (%p184) target = $region20
        $region19: #{multi_head_attention.1} parent=11 // pred_region
          _
        $region20: #{multi_head_attention.1} parent=11 // pred_fallthru
          _
        // Predicated region
        $region21: #{multi_head_attention.1} parent=11 // pred_check
          %p187 = pneg %p108
        $region22: #{multi_head_attention.1} parent=11 // pred_check_branch
          %189 = sbr.rel (%p187) target = $region24
        $region23: #{multi_head_attention.1} parent=11 // pred_region
          %191 = vsyncadd [#allocation6], 0
          %s192 = sshll.u32 %s3, 4
          %s193 = int_to_ptr.hbm [resolvable:$true] %s192
          %s194 = sshll.u32 [#allocation7], 4
          %s195 = int_to_ptr.vmem [resolvable:$true] %s194
          %200 = dma.hbm_to_vmem [thread:$0]  %s193, 512, %s195, [#allocation6], 128, 128, 8
        $region24: #{multi_head_attention.1} parent=11 // pred_fallthru
          _
        // Predicated region
        $region25: #{multi_head_attention.1} parent=11 // pred_check
          %p201 = pneg %p129
        $region26: #{multi_head_attention.1} parent=11 // pred_check_branch
          %203 = sbr.rel (%p201) target = $region28
        $region27: #{multi_head_attention.1} parent=11 // pred_region
          %205 = vsyncadd [#allocation9], 0
          %s207 = sshll.u32 %s4, 4
          %s208 = int_to_ptr.hbm [resolvable:$true] %s207
          %s209 = sshll.u32 [#allocation8], 4
          %s210 = int_to_ptr.vmem [resolvable:$true] %s209
          %212 = dma.hbm_to_vmem [thread:$0]  %s208, 16, %s210, [#allocation9]
        $region28: #{multi_head_attention.1} parent=11 // pred_fallthru
          _
      $region12: #{multi_head_attention.1} parent=5 // pred_fallthru
        _
      %p213 = scmp.lt.s32.totalorder %s19, 2
      // Predicated region
      $region29: #{multi_head_attention.1} parent=5 // pred_check
        %p214 = pneg %p213
      $region30: #{multi_head_attention.1} parent=5 // pred_check_branch
        %216 = sbr.rel (%p214) target = $region32
      $region31: #{multi_head_attention.1} parent=5 // pred_region
        // Predicated region
        $region33: #{multi_head_attention.1} parent=31 // pred_check
          %p217 = pneg %p39
        $region34: #{multi_head_attention.1} parent=31 // pred_check_branch
          %219 = sbr.rel (%p217) target = $region36
        $region35: #{multi_head_attention.1} parent=31 // pred_region
          %s220 = sand.u32 %s29, 1
          %s221 = scalar_lea.sflag [#allocation3], %s220
          %s222 = sand.u32 %s29, 1
          %s223 = smul.addr %s222, 8
          %s224 = scalar_lea.vmem [#allocation2], %s223
          %226 = vsyncadd %s221, 0
          %s227 = smul.addr %s19, 8
          %s228 = scalar_lea.hbm %s0, %s227
          %s230 = sshll.u32 %s228, 4
          %s231 = int_to_ptr.hbm [resolvable:$true] %s230
          %s232 = sshll.u32 %s224, 4
          %s233 = int_to_ptr.vmem [resolvable:$true] %s232
          %235 = dma.hbm_to_vmem [thread:$0]  %s231, 128, %s233, %s221
        $region36: #{multi_head_attention.1} parent=31 // pred_fallthru
          _
      $region32: #{multi_head_attention.1} parent=5 // pred_fallthru
        _
      %p236 = scmp.le.s32.totalorder 1, %s19
      %p237 = scmp.lt.s32.totalorder %s19, 3
      %p238 = pnand %p236, %p237
      %p239 = pneg %p238
      // Predicated region
      $region37: #{multi_head_attention.1} parent=5 // pred_check
        _
      $region38: #{multi_head_attention.1} parent=5 // pred_check_branch
        %241 = sbr.rel (%p238) target = $region40
      $region39: #{multi_head_attention.1} parent=5 // pred_region
        %s242 = ssub.s32 %s19, 1
        %s243 = sand.u32 %s32, 1
        %s244 = scalar_lea.sflag [#allocation3], %s243
        %s245 = sand.u32 %s32, 1
        %s246 = smul.addr %s245, 8
        %s247 = scalar_lea.vmem [#allocation2], %s246
        // Predicated region
        $region41: #{multi_head_attention.1} parent=39 // pred_check
          %p248 = pneg %p45
        $region42: #{multi_head_attention.1} parent=39 // pred_check_branch
          %250 = sbr.rel (%p248) target = $region44
        $region43: #{multi_head_attention.1} parent=39 // pred_region
          %252 = dma.done %s244, 128
        $region44: #{multi_head_attention.1} parent=39 // pred_fallthru
          _
        // Predicated region
        $region45: #{multi_head_attention.1} parent=39 // pred_check
          %p253 = pneg %p66
        $region46: #{multi_head_attention.1} parent=39 // pred_check_branch
          %255 = sbr.rel (%p253) target = $region48
        $region47: #{multi_head_attention.1} parent=39 // pred_region
          %257 = dma.done [#allocation6], 512
        $region48: #{multi_head_attention.1} parent=39 // pred_fallthru
          _
        // Predicated region
        $region49: #{multi_head_attention.1} parent=39 // pred_check
          %p258 = pneg %p108
        $region50: #{multi_head_attention.1} parent=39 // pred_check_branch
          %260 = sbr.rel (%p258) target = $region52
        $region51: #{multi_head_attention.1} parent=39 // pred_region
          %262 = dma.done [#allocation6], 512
        $region52: #{multi_head_attention.1} parent=39 // pred_fallthru
          _
        // Predicated region
        $region53: #{multi_head_attention.1} parent=39 // pred_check
          %p263 = pneg %p129
        $region54: #{multi_head_attention.1} parent=39 // pred_check_branch
          %265 = sbr.rel (%p263) target = $region56
        $region55: #{multi_head_attention.1} parent=39 // pred_region
          %267 = dma.done [#allocation9], 16
        $region56: #{multi_head_attention.1} parent=39 // pred_fallthru
          _
        %s268 = sand.u32 %s32, 1
        %s269 = scalar_lea.sflag [#allocation3], %s268
        %s270 = sand.u32 %s32, 1
        %s271 = smul.addr %s270, 8
        %s272 = scalar_lea.vmem [#allocation2], %s271
        %p273 = pneg %p45
        %p274 = pneg %p42
        %p275 = pneg %p66
        %p276 = pneg %p63
        %p277 = pneg %p87
        %p278 = pneg %p84
        %p279 = pneg %p108
        %p280 = pneg %p105
        %p281 = pneg %p129
        %p282 = pneg %p126
        %p283 = pneg %p155
        %p284 = pneg %p152
        %s285 = sand.u32 %s142, 1
        %s286 = scalar_lea.sflag [#allocation4], %s285
        %s287 = sand.u32 %s142, 1
        %s288 = smul.addr %s287, 8
        %s289 = scalar_lea.vmem [#allocation10], %s288
        %v290 = vld [vmem:[%s247] sm:$0xff]
        %v291 = vld [vmem:[#allocation5] sm:$0xff]
        %v292 = vld [vmem:[#allocation5 + $0x8] sm:$0xff]
        %v293 = vld [vmem:[#allocation5 + $0x10] sm:$0xff]
        %v294 = vld [vmem:[#allocation5 + $0x18] sm:$0xff]
        %v295 = vld [vmem:[%s2] sm:$0x1]
        %v297 = vperm.slane %v295, 0
        %vm299 = vcmask 261120
        %v301 = vsel %vm299, %v290, 0
        %303 = vmatpush.msra.mxu0 0.0
        %304 = vmatpush.msra.mxu0 0.0
        %305 = vmatpush.msra.mxu0 0.0
        %306 = vmatpush.msra.mxu0 0.0
        %307 = vmatpush.msra.mxu0 0.0
        %308 = vmatpush.msra.mxu0 0.0
        %309 = vmatpush.msra.mxu0 0.0
        %310 = vmatpush.msra.mxu0 0.0
        %311 = vmatpush.msra.mxu0 0.0
        %312 = vmatpush.msra.mxu0 0.0
        %313 = vmatpush.msra.mxu0 0.0
        %314 = vmatpush.msra.mxu0 0.0
        %315 = vmatpush.msra.mxu0 %v294
        %316 = vmatpush.msra.mxu0 %v293
        %317 = vmatpush.msra.mxu0 %v292
        %318 = vmatpush.msra.mxu0 %v291
        %319 = vmatmul.f32.gmra.mxu0 %v301
        %v320 = vpop.f32.mrf.mxu0
        %v321 = vadd.f32 %v297, %v320
        %322 = vdwg.mxu0
        %324 = vrot.lane.b32.xlu0 %v321, 96
        %v325 = vpop.permute.xlu0 %324
        %vm326 = vcmask 64512
        %v327 = vsel %vm326, %v321, 0
        %v329 = vsel %vm326, %v325, 0
        %331 = vmatpush.xpose.msra.mxu0 0.0
        %332 = vmatpush.xpose.msra.mxu0 0.0
        %333 = vmatpush.xpose.msra.mxu0 0.0
        %334 = vmatpush.xpose.msra.mxu0 0.0
        %335 = vmatpush.xpose.msra.mxu0 0.0
        %336 = vmatpush.xpose.msra.mxu0 0.0
        %337 = vmatpush.xpose.msra.mxu0 0.0
        %338 = vmatpush.xpose.msra.mxu0 0.0
        %339 = vmatpush.xpose.msra.mxu0 0.0
        %340 = vmatpush.xpose.msra.mxu0 0.0
        %341 = vmatpush.xpose.msra.mxu0 0.0
        %342 = vmatpush.xpose.msra.mxu0 0.0
        %343 = vmatpush.xpose.msra.mxu0 0.0
        %344 = vmatpush.xpose.msra.mxu0 0.0
        %345 = vmatpush.xpose.msra.mxu0 0.0
        %346 = vmatpush.xpose.msra.mxu0 %v329
        %347 = vmatmul.f32.gmra.mxu0 %v327
        %v348 = vpop.f32.mrf.mxu0
        %v349 = vadd.f32 0.0, %v348
        %350 = vdwg.mxu0
        %v351 = vsel %vm326, %v349, -inf
        %352 = vmax.xlane.f32.xlu0 %v351
        %v353 = vpop.xlane.xlu0 %352
        %v354 = vsub.f32 %v349, %v353
        %v355 = vmul.f32 %v354, 1.442695
        %v356 = vpow.pop %v355
        %v357 = vsel %vm326, %v356, 0.0
        %358 = vadd.xlane.f32.xlu0 %v357
        %v359 = vpop.xlane.xlu0 %358
        %v360 = vrcp.pop %v359
        %v361 = vmul.f32 %v359, %v360
        %v362 = vsub.f32 2.0, %v361
        %v363 = vmul.f32 %v360, %v362
        %v364 = vmul.f32 %v356, %v363
        %365 = vrot.lane.b32.xlu0 %v321, 64
        %v366 = vpop.permute.xlu0 %365
        %v369 = vsel %vm326, %v364, 0
        %371 = vmatpush.msra.mxu0 0.0
        %372 = vmatpush.msra.mxu0 0.0
        %373 = vmatpush.msra.mxu0 0.0
        %374 = vmatpush.msra.mxu0 0.0
        %375 = vmatpush.msra.mxu0 0.0
        %376 = vmatpush.msra.mxu0 0.0
        %377 = vmatpush.msra.mxu0 0.0
        %378 = vmatpush.msra.mxu0 0.0
        %379 = vmatpush.msra.mxu0 0.0
        %380 = vmatpush.msra.mxu0 0.0
        %381 = vmatpush.msra.mxu0 0.0
        %382 = vmatpush.msra.mxu0 0.0
        %383 = vmatpush.msra.mxu0 0.0
        %384 = vmatpush.msra.mxu0 0.0
        %385 = vmatpush.msra.mxu0 0.0
        %386 = vmatpush.msra.mxu0 %v366
        %387 = vmatmul.f32.gmra.mxu0 %v369
        %v388 = vpop.f32.mrf.mxu0
        %v389 = vadd.f32 0.0, %v388
        %390 = vdwg.mxu0
        %391 = vrot.lane.b32.xlu0 %v321, 120
        %v392 = vpop.permute.xlu0 %391
        %393 = vrot.lane.b32.xlu0 %v321, 88
        %v394 = vpop.permute.xlu0 %393
        %v395 = vsel %vm326, %v392, 0
        %v397 = vsel %vm326, %v394, 0
        %399 = vmatpush.xpose.msra.mxu0 0.0
        %400 = vmatpush.xpose.msra.mxu0 0.0
        %401 = vmatpush.xpose.msra.mxu0 0.0
        %402 = vmatpush.xpose.msra.mxu0 0.0
        %403 = vmatpush.xpose.msra.mxu0 0.0
        %404 = vmatpush.xpose.msra.mxu0 0.0
        %405 = vmatpush.xpose.msra.mxu0 0.0
        %406 = vmatpush.xpose.msra.mxu0 0.0
        %407 = vmatpush.xpose.msra.mxu0 0.0
        %408 = vmatpush.xpose.msra.mxu0 0.0
        %409 = vmatpush.xpose.msra.mxu0 0.0
        %410 = vmatpush.xpose.msra.mxu0 0.0
        %411 = vmatpush.xpose.msra.mxu0 0.0
        %412 = vmatpush.xpose.msra.mxu0 0.0
        %413 = vmatpush.xpose.msra.mxu0 0.0
        %414 = vmatpush.xpose.msra.mxu0 %v397
        %415 = vmatmul.f32.gmra.mxu0 %v395
        %v416 = vpop.f32.mrf.mxu0
        %v417 = vadd.f32 0.0, %v416
        %418 = vdwg.mxu0
        %v419 = vsel %vm326, %v417, -inf
        %420 = vmax.xlane.f32.xlu0 %v419
        %v421 = vpop.xlane.xlu0 %420
        %v422 = vsub.f32 %v417, %v421
        %v423 = vmul.f32 %v422, 1.442695
        %v424 = vpow.pop %v423
        %v425 = vsel %vm326, %v424, 0.0
        %426 = vadd.xlane.f32.xlu0 %v425
        %v427 = vpop.xlane.xlu0 %426
        %v428 = vrcp.pop %v427
        %v429 = vmul.f32 %v427, %v428
        %v430 = vsub.f32 2.0, %v429
        %v431 = vmul.f32 %v428, %v430
        %v432 = vmul.f32 %v424, %v431
        %433 = vrot.lane.b32.xlu0 %v321, 56
        %v434 = vpop.permute.xlu0 %433
        %v437 = vsel %vm326, %v432, 0
        %439 = vmatpush.msra.mxu0 0.0
        %440 = vmatpush.msra.mxu0 0.0
        %441 = vmatpush.msra.mxu0 0.0
        %442 = vmatpush.msra.mxu0 0.0
        %443 = vmatpush.msra.mxu0 0.0
        %444 = vmatpush.msra.mxu0 0.0
        %445 = vmatpush.msra.mxu0 0.0
        %446 = vmatpush.msra.mxu0 0.0
        %447 = vmatpush.msra.mxu0 0.0
        %448 = vmatpush.msra.mxu0 0.0
        %449 = vmatpush.msra.mxu0 0.0
        %450 = vmatpush.msra.mxu0 0.0
        %451 = vmatpush.msra.mxu0 0.0
        %452 = vmatpush.msra.mxu0 0.0
        %453 = vmatpush.msra.mxu0 0.0
        %454 = vmatpush.msra.mxu0 %v434
        %455 = vmatmul.f32.gmra.mxu0 %v437
        %v456 = vpop.f32.mrf.mxu0
        %v457 = vadd.f32 0.0, %v456
        %458 = vdwg.mxu0
        %459 = vrot.lane.b32.xlu0 %v321, 112
        %v460 = vpop.permute.xlu0 %459
        %461 = vrot.lane.b32.xlu0 %v321, 80
        %v462 = vpop.permute.xlu0 %461
        %v463 = vsel %vm326, %v460, 0
        %v465 = vsel %vm326, %v462, 0
        %467 = vmatpush.xpose.msra.mxu0 0.0
        %468 = vmatpush.xpose.msra.mxu0 0.0
        %469 = vmatpush.xpose.msra.mxu0 0.0
        %470 = vmatpush.xpose.msra.mxu0 0.0
        %471 = vmatpush.xpose.msra.mxu0 0.0
        %472 = vmatpush.xpose.msra.mxu0 0.0
        %473 = vmatpush.xpose.msra.mxu0 0.0
        %474 = vmatpush.xpose.msra.mxu0 0.0
        %475 = vmatpush.xpose.msra.mxu0 0.0
        %476 = vmatpush.xpose.msra.mxu0 0.0
        %477 = vmatpush.xpose.msra.mxu0 0.0
        %478 = vmatpush.xpose.msra.mxu0 0.0
        %479 = vmatpush.xpose.msra.mxu0 0.0
        %480 = vmatpush.xpose.msra.mxu0 0.0
        %481 = vmatpush.xpose.msra.mxu0 0.0
        %482 = vmatpush.xpose.msra.mxu0 %v465
        %483 = vmatmul.f32.gmra.mxu0 %v463
        %v484 = vpop.f32.mrf.mxu0
        %v485 = vadd.f32 0.0, %v484
        %486 = vdwg.mxu0
        %v487 = vsel %vm326, %v485, -inf
        %488 = vmax.xlane.f32.xlu0 %v487
        %v489 = vpop.xlane.xlu0 %488
        %v490 = vsub.f32 %v485, %v489
        %v491 = vmul.f32 %v490, 1.442695
        %v492 = vpow.pop %v491
        %v493 = vsel %vm326, %v492, 0.0
        %494 = vadd.xlane.f32.xlu0 %v493
        %v495 = vpop.xlane.xlu0 %494
        %v496 = vrcp.pop %v495
        %v497 = vmul.f32 %v495, %v496
        %v498 = vsub.f32 2.0, %v497
        %v499 = vmul.f32 %v496, %v498
        %v500 = vmul.f32 %v492, %v499
        %501 = vrot.lane.b32.xlu0 %v321, 48
        %v502 = vpop.permute.xlu0 %501
        %v505 = vsel %vm326, %v500, 0
        %507 = vmatpush.msra.mxu0 0.0
        %508 = vmatpush.msra.mxu0 0.0
        %509 = vmatpush.msra.mxu0 0.0
        %510 = vmatpush.msra.mxu0 0.0
        %511 = vmatpush.msra.mxu0 0.0
        %512 = vmatpush.msra.mxu0 0.0
        %513 = vmatpush.msra.mxu0 0.0
        %514 = vmatpush.msra.mxu0 0.0
        %515 = vmatpush.msra.mxu0 0.0
        %516 = vmatpush.msra.mxu0 0.0
        %517 = vmatpush.msra.mxu0 0.0
        %518 = vmatpush.msra.mxu0 0.0
        %519 = vmatpush.msra.mxu0 0.0
        %520 = vmatpush.msra.mxu0 0.0
        %521 = vmatpush.msra.mxu0 0.0
        %522 = vmatpush.msra.mxu0 %v502
        %523 = vmatmul.f32.gmra.mxu0 %v505
        %v524 = vpop.f32.mrf.mxu0
        %v525 = vadd.f32 0.0, %v524
        %526 = vdwg.mxu0
        %527 = vrot.lane.b32.xlu0 %v321, 104
        %v528 = vpop.permute.xlu0 %527
        %529 = vrot.lane.b32.xlu0 %v321, 72
        %v530 = vpop.permute.xlu0 %529
        %v531 = vsel %vm326, %v528, 0
        %v533 = vsel %vm326, %v530, 0
        %535 = vmatpush.xpose.msra.mxu0 0.0
        %536 = vmatpush.xpose.msra.mxu0 0.0
        %537 = vmatpush.xpose.msra.mxu0 0.0
        %538 = vmatpush.xpose.msra.mxu0 0.0
        %539 = vmatpush.xpose.msra.mxu0 0.0
        %540 = vmatpush.xpose.msra.mxu0 0.0
        %541 = vmatpush.xpose.msra.mxu0 0.0
        %542 = vmatpush.xpose.msra.mxu0 0.0
        %543 = vmatpush.xpose.msra.mxu0 0.0
        %544 = vmatpush.xpose.msra.mxu0 0.0
        %545 = vmatpush.xpose.msra.mxu0 0.0
        %546 = vmatpush.xpose.msra.mxu0 0.0
        %547 = vmatpush.xpose.msra.mxu0 0.0
        %548 = vmatpush.xpose.msra.mxu0 0.0
        %549 = vmatpush.xpose.msra.mxu0 0.0
        %550 = vmatpush.xpose.msra.mxu0 %v533
        %551 = vmatmul.f32.gmra.mxu0 %v531
        %v552 = vpop.f32.mrf.mxu0
        %v553 = vadd.f32 0.0, %v552
        %554 = vdwg.mxu0
        %v555 = vsel %vm326, %v553, -inf
        %556 = vmax.xlane.f32.xlu0 %v555
        %v557 = vpop.xlane.xlu0 %556
        %v558 = vsub.f32 %v553, %v557
        %v559 = vmul.f32 %v558, 1.442695
        %v560 = vpow.pop %v559
        %v561 = vsel %vm326, %v560, 0.0
        %562 = vadd.xlane.f32.xlu0 %v561
        %v563 = vpop.xlane.xlu0 %562
        %v564 = vrcp.pop %v563
        %v565 = vmul.f32 %v563, %v564
        %v566 = vsub.f32 2.0, %v565
        %v567 = vmul.f32 %v564, %v566
        %v568 = vmul.f32 %v560, %v567
        %569 = vrot.lane.b32.xlu0 %v321, 40
        %v570 = vpop.permute.xlu0 %569
        %v573 = vsel %vm326, %v568, 0
        %575 = vmatpush.msra.mxu0 0.0
        %576 = vmatpush.msra.mxu0 0.0
        %577 = vmatpush.msra.mxu0 0.0
        %578 = vmatpush.msra.mxu0 0.0
        %579 = vmatpush.msra.mxu0 0.0
        %580 = vmatpush.msra.mxu0 0.0
        %581 = vmatpush.msra.mxu0 0.0
        %582 = vmatpush.msra.mxu0 0.0
        %583 = vmatpush.msra.mxu0 0.0
        %584 = vmatpush.msra.mxu0 0.0
        %585 = vmatpush.msra.mxu0 0.0
        %586 = vmatpush.msra.mxu0 0.0
        %587 = vmatpush.msra.mxu0 0.0
        %588 = vmatpush.msra.mxu0 0.0
        %589 = vmatpush.msra.mxu0 0.0
        %590 = vmatpush.msra.mxu0 %v570
        %591 = vmatmul.f32.gmra.mxu0 %v573
        %v592 = vpop.f32.mrf.mxu0
        %v593 = vadd.f32 0.0, %v592
        %594 = vdwg.mxu0
        %596 = vrot.lane.b32.xlu0 %v457, 8
        %v597 = vpop.permute.xlu0 %596
        %600 = vrot.lane.b32.xlu0 %v525, 16
        %v601 = vpop.permute.xlu0 %600
        %604 = vrot.lane.b32.xlu0 %v593, 24
        %v605 = vpop.permute.xlu0 %604
        %v607 = vsel %vm326, %v389, %v597
        %vm608 = vcmask 130048
        %v609 = vsel %vm608, %v607, %v601
        %vm610 = vcmask 195584
        %v611 = vsel %vm610, %v609, %v605
        %v612 = vld [vmem:[#allocation7] sm:$0xff]
        %v613 = vld [vmem:[#allocation7 + $0x8] sm:$0xff]
        %v614 = vld [vmem:[#allocation7 + $0x10] sm:$0xff]
        %v615 = vld [vmem:[#allocation7 + $0x18] sm:$0xff]
        %v616 = vld [vmem:[#allocation8] sm:$0x1]
        %v618 = vperm.slane %v616, 0
        %v621 = vsel %vm299, %v611, 0
        %623 = vmatpush.msra.mxu0 0.0
        %624 = vmatpush.msra.mxu0 0.0
        %625 = vmatpush.msra.mxu0 0.0
        %626 = vmatpush.msra.mxu0 0.0
        %627 = vmatpush.msra.mxu0 0.0
        %628 = vmatpush.msra.mxu0 0.0
        %629 = vmatpush.msra.mxu0 0.0
        %630 = vmatpush.msra.mxu0 0.0
        %631 = vmatpush.msra.mxu0 0.0
        %632 = vmatpush.msra.mxu0 0.0
        %633 = vmatpush.msra.mxu0 0.0
        %634 = vmatpush.msra.mxu0 0.0
        %635 = vmatpush.msra.mxu0 %v615
        %636 = vmatpush.msra.mxu0 %v614
        %637 = vmatpush.msra.mxu0 %v613
        %638 = vmatpush.msra.mxu0 %v612
        %639 = vmatmul.f32.gmra.mxu0 %v621
        %v640 = vpop.f32.mrf.mxu0
        %v641 = vadd.f32 %v618, %v640
        %642 = vdwg.mxu0
        %643 = vst.msk [vmem:[%s289] sm:$0xff] %vm299, %v641
        %s644 = sand.u32 %s142, 1
        %s645 = scalar_lea.sflag [#allocation4], %s644
        %s646 = sand.u32 %s142, 1
        %s647 = smul.addr %s646, 8
        %s648 = scalar_lea.vmem [#allocation10], %s647
        // Predicated region
        $region57: #{multi_head_attention.1} parent=39 // pred_check
          %p649 = pneg %p152
        $region58: #{multi_head_attention.1} parent=39 // pred_check_branch
          %651 = sbr.rel (%p649) target = $region60
        $region59: #{multi_head_attention.1} parent=39 // pred_region
          %653 = vsyncadd %s645, 0
          %s654 = smul.addr %s24, 8
          %s655 = scalar_lea.hbm %s5, %s654
          %s657 = sshll.u32 %s648, 4
          %s658 = int_to_ptr.vmem [resolvable:$true] %s657
          %s659 = sshll.u32 %s655, 4
          %s660 = int_to_ptr.hbm [resolvable:$true] %s659
          %662 = dma.vmem_to_hbm [thread:$0]  %s658, 128, %s660, %s645
        $region60: #{multi_head_attention.1} parent=39 // pred_fallthru
          _
      $region40: #{multi_head_attention.1} parent=5 // pred_fallthru
        _
      %p663 = scmp.le.s32.totalorder 2, %s19
      // Predicated region
      $region61: #{multi_head_attention.1} parent=5 // pred_check
        %p664 = pneg %p663
      $region62: #{multi_head_attention.1} parent=5 // pred_check_branch
        %666 = sbr.rel (%p664) target = $region64
      $region63: #{multi_head_attention.1} parent=5 // pred_region
        %s667 = ssub.s32 %s19, 2
        // Predicated region
        $region65: #{multi_head_attention.1} parent=63 // pred_check
          %p668 = pneg %p158
        $region66: #{multi_head_attention.1} parent=63 // pred_check_branch
          %670 = sbr.rel (%p668) target = $region68
        $region67: #{multi_head_attention.1} parent=63 // pred_region
          %s671 = sand.u32 %s143, 1
          %s672 = scalar_lea.sflag [#allocation4], %s671
          %s673 = sand.u32 %s143, 1
          %s674 = smul.addr %s673, 8
          %s675 = scalar_lea.vmem [#allocation10], %s674
          %677 = dma.done %s672, 128
        $region68: #{multi_head_attention.1} parent=63 // pred_fallthru
          _
      $region64: #{multi_head_attention.1} parent=5 // pred_fallthru
        _
    $region6: #{multi_head_attention.1} parent=1 // loop_footer
      %s23 = sadd.s32 1, %s19
    $region7: #{multi_head_attention.1} parent=1 // loop_footer_branch
      %18 = sbr.rel target = $region3
    $region8: #{multi_head_attention.1} parent=1 // loop_exit
      _
    %678 = vsyncpa [#allocation3], 1
    %s679 = scalar_lea.sflag [#allocation3], 1
    %680 = vsyncpa %s679, 1
    %681 = vsyncpa [#allocation6], 1
    %682 = vsyncpa [#allocation9], 1
    %683 = vsyncpa [#allocation4], 1
    %s684 = scalar_lea.sflag [#allocation4], 1
    %685 = vsyncpa %s684, 1

</llo_original>
